<compile_context>
chip_gen: v6e
topology: v6e:2x2x1
jax: 0.10.0
libtpu: 0.0.40
codegen_flags: <defaults>
</compile_context>

<pallas_src>
import jax
import jax.numpy as jnp
from jax import lax
from jax.experimental import pallas as pl
from jax.experimental.pallas import tpu as pltpu

LANES = 128              # vreg lane width; every padded matrix is LANES wide
SLAB_ROWS = 3 * LANES    # [W1_aug ; W2_aug ; W3_aug]


def _make_kernel(hidden_size, unroll):
    bias_lane = hidden_size + hidden_size // 2   # lane carrying the constant 1.0

    def kernel(x_ref, h0_ref, slab_ref, out_ref):
        # x_ref   : (T, TB, 128)  row = [x_t | 1.0 | 0...]   (per agent, per step)
        # h0_ref  : (TB, 128)     row = [0.. | h0 in lanes [H, H+H/2) | 0..]
        # slab_ref: (384, 128)    [W1_aug ; W2_aug ; W3_aug]
        # out_ref : (T, TB, 128)  lanes [0,2) = action_t, lanes [H, H+H/2) = h_t
        t_steps, tb, _ = out_ref.shape
        w1 = slab_ref[0:LANES, :]
        w2 = slab_ref[LANES:2 * LANES, :]
        w3 = slab_ref[2 * LANES:3 * LANES, :]

        lane = lax.broadcasted_iota(jnp.int32, (t_steps * tb, LANES), 1)
        bias1 = jnp.where(lane == bias_lane, jnp.float32(1.0), jnp.float32(0.0))

        # (1) input layer for ALL timesteps / agents in one MXU dot.
        x_all = x_ref[...].reshape(t_steps * tb, LANES)
        a_all = jnp.tanh(jnp.dot(x_all.astype(w1.dtype), w1,
                                 preferred_element_type=jnp.float32))
        # Stash a_t (+ the RNN-cell bias-1 lane) in the output buffer (scratch
        # reuse).  a_t occupies lanes [0, H), the 1.0 sits in lane H+H/2, and all
        # other lanes are exactly 0 (tanh(0) == 0), so adding h_{t-1} (lanes
        # [H, H+H/2)) below cannot collide.
        out_ref[...] = (a_all + bias1).reshape(t_steps, tb, LANES)

        # (2) only the recurrent dot stays in the serial loop:
        #     h_t = tanh([a_t | h_{t-1} | 1] @ [W_ih ; W_hh ; b_ih+b_hh])
        def step(t, h_prev):
            z = out_ref[t] + h_prev
            h_new = jnp.tanh(jnp.dot(z.astype(w2.dtype), w2,
                                     preferred_element_type=jnp.float32))
            out_ref[t] = h_new            # overwrite the stash with h_t
            return h_new

        lax.fori_loop(0, t_steps, step, h0_ref[...], unroll=unroll)

        # (3) extra tanh + output layer for ALL timesteps in one MXU dot
        #     (b_out folded in via the same bias-1 lane); merged lane-dense store.
        h_all = out_ref[...].reshape(t_steps * tb, LANES)
        r_all = jnp.tanh(h_all) + bias1
        o_all = jnp.tanh(jnp.dot(r_all.astype(w3.dtype), w3,
                                 preferred_element_type=jnp.float32))
        out_ref[...] = (h_all + o_all).reshape(t_steps, tb, LANES)

    return kernel


def pack_params(params, input_size, hidden_size, dtype=jnp.float32):
    """Pack all weights & biases once into a (384, 128) slab.

    Layout (bias folding via an augmented constant-1 lane at H + H//2):
      W1_aug rows [0,in)     = w_in  -> cols [0,H)       ; row `in`        = b_in
      W2_aug rows [0,H)      = w_ih  -> cols [H,H+H/2)   ; rows [H,H+H/2)  = w_hh
             row  H+H/2      = b_ih + b_hh
      W3_aug rows [H,H+H/2)  = w_out -> cols [0,2)       ; row  H+H/2      = b_out
    """
    h = hidden_size
    bias_lane = h + h // 2
    assert input_size + 1 <= LANES and bias_lane + 1 <= LANES and h >= 2

    w1 = jnp.zeros((LANES, LANES), jnp.float32)
    w1 = w1.at[0:input_size, 0:h].set(params["w_in"])
    w1 = w1.at[input_size, 0:h].set(params["b_in"][0])

    w2 = jnp.zeros((LANES, LANES), jnp.float32)
    w2 = w2.at[0:h, h:bias_lane].set(params["w_ih"])
    w2 = w2.at[h:bias_lane, h:bias_lane].set(params["w_hh"])
    w2 = w2.at[bias_lane, h:bias_lane].set(params["b_ih"][0] + params["b_hh"][0])

    w3 = jnp.zeros((LANES, LANES), jnp.float32)
    w3 = w3.at[h:bias_lane, 0:2].set(params["w_out"])
    w3 = w3.at[bias_lane, 0:2].set(params["b_out"][0])

    return jnp.concatenate([w1, w2, w3], axis=0).astype(dtype)   # (384, 128)


def _rollout_core(x_seq, h0, slab, *, input_size, hidden_size, batch_tile=8):
    """x_seq: (T, B, input_size); h0: (B, H//2); slab: (384, 128).

    Returns (actions (T, B, 2), hiddens (T, B, H//2))."""
    t_steps, batch, _ = x_seq.shape
    h_half = hidden_size // 2
    bias_lane = hidden_size + h_half
    assert batch_tile % 8 == 0, "batch_tile must be a multiple of the 8-row sublane tile"
    b_pad = -(-batch // batch_tile) * batch_tile
    num_tiles = b_pad // batch_tile

    # Pack inputs into one lane-dense buffer with the input-layer bias-1 lane.
    xz = jnp.zeros((t_steps, b_pad, LANES), jnp.float32)
    xz = xz.at[:, :batch, :input_size].set(x_seq.astype(jnp.float32))
    xz = xz.at[:, :batch, input_size].set(1.0)
    # Hidden state pre-shifted into lanes [H, H+H/2) (the W2_aug input rows).
    h0z = jnp.zeros((b_pad, LANES), jnp.float32)
    h0z = h0z.at[:batch, hidden_size:bias_lane].set(h0.astype(jnp.float32))

    kernel = _make_kernel(hidden_size, unroll=bool(t_steps <= 8))

    combined = pl.pallas_call(
        kernel,
        out_shape=jax.ShapeDtypeStruct((t_steps, b_pad, LANES), jnp.float32),
        grid_spec=pltpu.PrefetchScalarGridSpec(
            num_scalar_prefetch=0,
            grid=(num_tiles,),
            in_specs=[
                pl.BlockSpec((t_steps, batch_tile, LANES), lambda i: (0, i, 0)),
                pl.BlockSpec((batch_tile, LANES), lambda i: (i, 0)),
                # constant index_map -> weight slab DMA'd once, resident in VMEM
                pl.BlockSpec((SLAB_ROWS, LANES), lambda i: (0, 0)),
            ],
            out_specs=pl.BlockSpec((t_steps, batch_tile, LANES), lambda i: (0, i, 0)),
        ),
        compiler_params=pltpu.CompilerParams(
            # batch tiles are independent -> shardable across v7x's two TensorCores
            dimension_semantics=("parallel",)),
    )(xz, h0z, slab)

    actions = combined[:, :batch, 0:2]                       # tanh(output_layer(...)) per step
    hiddens = combined[:, :batch, hidden_size:bias_lane]     # h_t per step
    return actions, hiddens


avoid_model_rnn_rollout = jax.jit(
    _rollout_core, static_argnames=("input_size", "hidden_size", "batch_tile"))


def _forward_core(inp, hidden_state, slab, *, input_size, hidden_size):
    """Exact AvoidModelRNN.forward: one step, one agent -> (out (1,2), new_hidden (1,H//2))."""
    x_seq = jnp.reshape(inp, (1, 1, input_size))
    h0 = jnp.reshape(hidden_state, (1, hidden_size // 2))
    actions, hiddens = _rollout_core(x_seq, h0, slab, input_size=input_size,
                                     hidden_size=hidden_size, batch_tile=8)
    return actions[0], hiddens[0]


avoid_model_rnn_forward = jax.jit(
    _forward_core, static_argnames=("input_size", "hidden_size"))


def init_params(key, input_size=6, hidden_size=32):
    """Deterministic synthetic params, PyTorch-style uniform(-1/sqrt(fan_in), ...)."""
    h = hidden_size
    h_half = hidden_size // 2
    ks = jax.random.split(key, 8)

    def u(k, shape, fan_in):
        bound = 1.0 / jnp.sqrt(jnp.float32(fan_in))
        return jax.random.uniform(k, shape, jnp.float32, -bound, bound)

    return {
        # input_layer: Linear(input_size, hidden_size), stored transposed (in, out)
        "w_in":  u(ks[0], (input_size, h), input_size),
        "b_in":  u(ks[1], (1, h), input_size),
        # hidden_layer: RNN(hidden_size, hidden_size // 2, tanh), stored transposed
        "w_ih":  u(ks[2], (h, h_half), h_half),
        "b_ih":  u(ks[3], (1, h_half), h_half),
        "w_hh":  u(ks[4], (h_half, h_half), h_half),
        "b_hh":  u(ks[5], (1, h_half), h_half),
        # output_layer: Linear(hidden_size // 2, 2), stored transposed
        "w_out": u(ks[6], (h_half, 2), h_half),
        "b_out": u(ks[7], (1, 2), h_half),
    }


if __name__ == "__main__":
    input_size, hidden_size = 6, 32
    h_half = hidden_size // 2
    key = jax.random.PRNGKey(0)
    pkey, xkey, skey = jax.random.split(key, 3)

    params = init_params(pkey, input_size=input_size, hidden_size=hidden_size)
    # One-time packing.  Pass dtype=jnp.bfloat16 here for large-batch v6e/v7x runs.
    slab = pack_params(params, input_size, hidden_size)

    # pure-JAX reference for one module step
    def ref_step(x, h):
        a = jnp.tanh(x @ params["w_in"] + params["b_in"])
        h_new = jnp.tanh(a @ params["w_ih"] + params["b_ih"]
                         + h @ params["w_hh"] + params["b_hh"])
        o = jnp.tanh(jnp.tanh(h_new) @ params["w_out"] + params["b_out"])
        return o, h_new

    # --- single-step path (the torch module's forward) -----------------------
    # six sensor scalars (left, right, center, robot_found, floor_color,
    # distance_to_wall) packed into a (1, 6) row; hidden_state=None -> zeros.
    inp = jax.random.uniform(xkey, (1, input_size), jnp.float32)
    h0 = jnp.zeros((1, h_half), jnp.float32)

    out1, h1 = avoid_model_rnn_forward(inp, h0, slab,
                                       input_size=input_size, hidden_size=hidden_size)
    out2, h2 = avoid_model_rnn_forward(inp, h1, slab,
                                       input_size=input_size, hidden_size=hidden_size)
    jax.block_until_ready((out1, h1, out2, h2))

    o_ref1, h_ref1 = ref_step(inp, h0)
    o_ref2, h_ref2 = ref_step(inp, h_ref1)
    assert out1.shape == (1, 2) and h1.shape == (1, h_half)
    assert jnp.allclose(out1, o_ref1, atol=1e-4), (out1, o_ref1)
    assert jnp.allclose(h1, h_ref1, atol=1e-4)
    assert jnp.allclose(out2, o_ref2, atol=1e-4)
    assert jnp.allclose(h2, h_ref2, atol=1e-4)

    # --- batched multi-step rollout: time loop + agent batch inside ONE kernel
    t_steps, batch = 8, 4
    xs = jax.random.uniform(skey, (t_steps, batch, input_size), jnp.float32,
                            minval=-1.0, maxval=1.0)
    h0b = jnp.zeros((batch, h_half), jnp.float32)
    acts, hids = avoid_model_rnn_rollout(xs, h0b, slab,
                                         input_size=input_size,
                                         hidden_size=hidden_size, batch_tile=8)
    jax.block_until_ready((acts, hids))

    h_run = h0b
    acts_ref = []
    for t in range(t_steps):
        o_r, h_run = ref_step(xs[t], h_run)
        acts_ref.append(o_r)
    acts_ref = jnp.stack(acts_ref)
    assert acts.shape == (t_steps, batch, 2) and hids.shape == (t_steps, batch, h_half)
    assert jnp.allclose(acts, acts_ref, atol=1e-4), float(jnp.max(jnp.abs(acts - acts_ref)))
    assert jnp.allclose(hids[-1], h_run, atol=1e-4)

    print("KERNEL_OK")
</pallas_src>

<mosaic_0001>
module attributes {stable_mosaic.version = 11 : i64} {
  func.func @kernel(%arg0: i32, %arg1: memref<1x8x128xf32, #tpu.memory_space<vmem>>, %arg2: memref<8x128xf32, #tpu.memory_space<vmem>>, %arg3: memref<384x128xf32, #tpu.memory_space<vmem>>, %arg4: memref<1x8x128xf32, #tpu.memory_space<vmem>>) attributes {dimension_semantics = [#tpu.dimension_semantics<parallel>], iteration_bounds = array<i64: 1>, scalar_prefetch = 0 : i64, scratch_operands = 0 : i64, tpu.core_type = #tpu.core_type<tc>, window_params = [{transform_indices = @transform_0, window_bounds = array<i64: 1, 8, 128>}, {transform_indices = @transform_1, window_bounds = array<i64: 8, 128>}, {pipeline_mode = #tpu.pipeline_mode<synchronous>, transform_indices = @transform_2, window_bounds = array<i64: 384, 128>}, {transform_indices = @transform_3, window_bounds = array<i64: 1, 8, 128>}]} {
    %c0 = arith.constant 0 : index
    %c0_0 = arith.constant 0 : index
    %0 = vector.load %arg3[%c0, %c0_0] : memref<384x128xf32, #tpu.memory_space<vmem>>, vector<128x128xf32>
    %c128 = arith.constant 128 : index
    %c0_1 = arith.constant 0 : index
    %1 = vector.load %arg3[%c128, %c0_1] : memref<384x128xf32, #tpu.memory_space<vmem>>, vector<128x128xf32>
    %c256 = arith.constant 256 : index
    %c0_2 = arith.constant 0 : index
    %2 = vector.load %arg3[%c256, %c0_2] : memref<384x128xf32, #tpu.memory_space<vmem>>, vector<128x128xf32>
    %3 = tpu.iota {dimensions = array<i32: 1>} : vector<8x128xi32>
    %c48_i32 = arith.constant 48 : i32
    %4 = vector.broadcast %c48_i32 : i32 to vector<8x128xi32>
    %5 = arith.cmpi eq, %3, %4 : vector<8x128xi32>
    %cst = arith.constant 1.000000e+00 : f32
    %cst_3 = arith.constant 0.000000e+00 : f32
    %6 = vector.broadcast %cst : f32 to vector<8x128xf32>
    %7 = vector.broadcast %cst_3 : f32 to vector<8x128xf32>
    %8 = arith.select %5, %6, %7 : vector<8x128xi1>, vector<8x128xf32>
    %c0_4 = arith.constant 0 : index
    %c0_5 = arith.constant 0 : index
    %c0_6 = arith.constant 0 : index
    %9 = vector.load %arg1[%c0_4, %c0_5, %c0_6] : memref<1x8x128xf32, #tpu.memory_space<vmem>>, vector<1x8x128xf32>
    %10 = vector.shape_cast %9 : vector<1x8x128xf32> to vector<8x128xf32>
    %cst_7 = arith.constant dense<0.000000e+00> : vector<8x128xf32>
    %11 = tpu.matmul %10, %0, %cst_7 {dimension_numbers = #tpu.dot_dimension_numbers<[1], [0], [0], [1], [0, 0, 1, 1], [], []>} : vector<8x128xf32>, vector<128x128xf32>, vector<8x128xf32> -> vector<8x128xf32>
    %12 = math.tanh %11 : vector<8x128xf32>
    %13 = arith.addf %12, %8 : vector<8x128xf32>
    %14 = vector.shape_cast %13 : vector<8x128xf32> to vector<1x8x128xf32>
    %c0_8 = arith.constant 0 : index
    %c0_9 = arith.constant 0 : index
    %c0_10 = arith.constant 0 : index
    %15 = vector.load %arg4[%c0_8, %c0_9, %c0_10] : memref<1x8x128xf32, #tpu.memory_space<vmem>>, vector<1x8x128xf32>
    tpu.vector_store %arg4[%c0_8, %c0_9, %c0_10], %14 {strides = array<i32>} : memref<1x8x128xf32, #tpu.memory_space<vmem>>, vector<1x8x128xf32>,
    %c0_11 = arith.constant 0 : index
    %c0_12 = arith.constant 0 : index
    %16 = vector.load %arg2[%c0_11, %c0_12] : memref<8x128xf32, #tpu.memory_space<vmem>>, vector<8x128xf32>
    %c0_i32 = arith.constant 0 : i32
    %17 = arith.index_cast %c0_i32 : i32 to index
    %c0_13 = arith.constant 0 : index
    %c0_14 = arith.constant 0 : index
    %18 = vector.load %arg4[%17, %c0_13, %c0_14] : memref<1x8x128xf32, #tpu.memory_space<vmem>>, vector<1x8x128xf32>
    %19 = vector.shape_cast %18 : vector<1x8x128xf32> to vector<8x128xf32>
    %20 = arith.addf %19, %16 : vector<8x128xf32>
    %cst_15 = arith.constant dense<0.000000e+00> : vector<8x128xf32>
    %21 = tpu.matmul %20, %1, %cst_15 {dimension_numbers = #tpu.dot_dimension_numbers<[1], [0], [0], [1], [0, 0, 1, 1], [], []>} : vector<8x128xf32>, vector<128x128xf32>, vector<8x128xf32> -> vector<8x128xf32>
    %22 = math.tanh %21 : vector<8x128xf32>
    %23 = arith.index_cast %c0_i32 : i32 to index
    %c0_16 = arith.constant 0 : index
    %c0_17 = arith.constant 0 : index
    %24 = vector.load %arg4[%23, %c0_16, %c0_17] : memref<1x8x128xf32, #tpu.memory_space<vmem>>, vector<1x8x128xf32>
    %25 = vector.shape_cast %24 : vector<1x8x128xf32> to vector<8x128xf32>
    %26 = vector.shape_cast %22 : vector<8x128xf32> to vector<1x8x128xf32>
    tpu.vector_store %arg4[%23, %c0_16, %c0_17], %26 {strides = array<i32>} : memref<1x8x128xf32, #tpu.memory_space<vmem>>, vector<1x8x128xf32>,
    %c1_i32 = arith.constant 1 : i32
    %c0_18 = arith.constant 0 : index
    %c0_19 = arith.constant 0 : index
    %c0_20 = arith.constant 0 : index
    %27 = vector.load %arg4[%c0_18, %c0_19, %c0_20] : memref<1x8x128xf32, #tpu.memory_space<vmem>>, vector<1x8x128xf32>
    %28 = vector.shape_cast %27 : vector<1x8x128xf32> to vector<8x128xf32>
    %29 = math.tanh %28 : vector<8x128xf32>
    %30 = arith.addf %29, %8 : vector<8x128xf32>
    %cst_21 = arith.constant dense<0.000000e+00> : vector<8x128xf32>
    %31 = tpu.matmul %30, %2, %cst_21 {dimension_numbers = #tpu.dot_dimension_numbers<[1], [0], [0], [1], [0, 0, 1, 1], [], []>} : vector<8x128xf32>, vector<128x128xf32>, vector<8x128xf32> -> vector<8x128xf32>
    %32 = math.tanh %31 : vector<8x128xf32>
    %33 = arith.addf %28, %32 : vector<8x128xf32>
    %34 = vector.shape_cast %33 : vector<8x128xf32> to vector<1x8x128xf32>
    %c0_22 = arith.constant 0 : index
    %c0_23 = arith.constant 0 : index
    %c0_24 = arith.constant 0 : index
    %35 = vector.load %arg4[%c0_22, %c0_23, %c0_24] : memref<1x8x128xf32, #tpu.memory_space<vmem>>, vector<1x8x128xf32>
    tpu.vector_store %arg4[%c0_22, %c0_23, %c0_24], %34 {strides = array<i32>} : memref<1x8x128xf32, #tpu.memory_space<vmem>>, vector<1x8x128xf32>,
    return
  }
  func.func @transform_0(%arg0: i32) -> (i32, i32, i32) {
    %c0_i32 = arith.constant 0 : i32
    %c0_i32_0 = arith.constant 0 : i32
    %c0_i32_1 = arith.constant 0 : i32
    return %c0_i32, %arg0, %c0_i32_0 : i32, i32, i32
  }
  func.func @transform_1(%arg0: i32) -> (i32, i32) {
    %c0_i32 = arith.constant 0 : i32
    %c0_i32_0 = arith.constant 0 : i32
    return %arg0, %c0_i32 : i32, i32
  }
  func.func @transform_2(%arg0: i32) -> (i32, i32) {
    %c0_i32 = arith.constant 0 : i32
    %c0_i32_0 = arith.constant 0 : i32
    %c0_i32_1 = arith.constant 0 : i32
    return %c0_i32, %c0_i32_0 : i32, i32
  }
  func.func @transform_3(%arg0: i32) -> (i32, i32, i32) {
    %c0_i32 = arith.constant 0 : i32
    %c0_i32_0 = arith.constant 0 : i32
    %c0_i32_1 = arith.constant 0 : i32
    return %c0_i32, %arg0, %c0_i32_0 : i32, i32, i32
  }
}

</mosaic_0001>

<llo_original>
// kernel: _forward_core.1
$region0: #{_forward_core.1}
  #allocation0 [shape = 'u32[]', space=smem, size = 0x4, offset = 0x4, fixed_abs, tag = 'smem constant byte address 0x4 - core index']
  #allocation1 [shape = 'u32[144,128]{1,0:T(1,128)}', space=vmem, size = 0x12000, scoped, tag = 'internal scratch']
  %s0 = inlined_call_operand.vmem [shape: f32[1,8,128], index: 0, kind: input, shape index: {}]
  %s1 = inlined_call_operand.vmem [shape: f32[8,128], index: 1, kind: input, shape index: {}]
  %s2 = inlined_call_operand.hbm [shape: f32[384,128], index: 2, kind: input, shape index: {}]
  %s3 = inlined_call_operand.vmem [shape: f32[1,8,128], index: 3, kind: output, shape index: {}]
  %s4 = sld [smem:[#allocation0]]
  $region26: #{_forward_core.1} parent=0
    _
  %s6 = ssub.s32 1, %s4
  %s7 = scalar_select 0, %s6, %s4
  $region1: #{_forward_core.1} parent=0
    #allocation2 [shape = 'u8[196608]{0}', space=vmem, size = 0x30000, scoped, tag = 'input window, operand 2, single buffered']
    #allocation3 [shape = 's32[1]{0}', space=sflag, size = 0x4, scoped, tag = 'scoped memory for _forward_core.1']
    %8 = vsyncpa [#allocation3], 0
    // Predicated region
    $region2: #{_forward_core.1} parent=1 // pred_check
      _
    $region3: #{_forward_core.1} parent=1 // pred_check_branch
      %10 = sbr.rel (0) target = $region5
    $region4: #{_forward_core.1} parent=1 // pred_region
      _
    $region5: #{_forward_core.1} parent=1 // pred_fallthru
      _
    // Predicated region
    $region6: #{_forward_core.1} parent=1 // pred_check
      _
    $region7: #{_forward_core.1} parent=1 // pred_check_branch
      %12 = sbr.rel (0) target = $region9
    $region8: #{_forward_core.1} parent=1 // pred_region
      _
    $region9: #{_forward_core.1} parent=1 // pred_fallthru
      _
    // Predicated region
    $region10: #{_forward_core.1} parent=1 // pred_check
      _
    $region11: #{_forward_core.1} parent=1 // pred_check_branch
      %14 = sbr.rel (0) target = $region13
    $region12: #{_forward_core.1} parent=1 // pred_region
      %s16 = ssub.s32 6144, 6144
      %17 = vsyncadd [#allocation3], %s16
      %s18 = sshll.u32 [#allocation2], 4
      %s19 = int_to_ptr.vmem [resolvable:$true] %s18
      %24 = dma.hbm_to_vmem [thread:$0]  %s2, 6144, %s19, [#allocation3], 128, 128, 8
    $region13: #{_forward_core.1} parent=1 // pred_fallthru
      _
    // Predicated region
    $region14: #{_forward_core.1} parent=1 // pred_check
      _
    $region15: #{_forward_core.1} parent=1 // pred_check_branch
      %26 = sbr.rel (0) target = $region17
    $region16: #{_forward_core.1} parent=1 // pred_region
      %27 = dma.done [#allocation3], 6144
    $region17: #{_forward_core.1} parent=1 // pred_fallthru
      _
    %v28 = vld [vmem:[#allocation2] sm:$0xff]
    %v29 = vld [vmem:[#allocation2 + $0x8] sm:$0xff]
    %v30 = vld [vmem:[#allocation2 + $0x10] sm:$0xff]
    %v31 = vld [vmem:[#allocation2 + $0x18] sm:$0xff]
    %v32 = vld [vmem:[#allocation2 + $0x20] sm:$0xff]
    %v33 = vld [vmem:[#allocation2 + $0x28] sm:$0xff]
    %v34 = vld [vmem:[#allocation2 + $0x30] sm:$0xff]
    %v35 = vld [vmem:[#allocation2 + $0x38] sm:$0xff]
    %v36 = vld [vmem:[#allocation2 + $0x40] sm:$0xff]
    %v37 = vld [vmem:[#allocation2 + $0x48] sm:$0xff]
    %v38 = vld [vmem:[#allocation2 + $0x50] sm:$0xff]
    %v39 = vld [vmem:[#allocation2 + $0x58] sm:$0xff]
    %v40 = vld [vmem:[#allocation2 + $0x60] sm:$0xff]
    %v41 = vld [vmem:[#allocation2 + $0x68] sm:$0xff]
    %v42 = vld [vmem:[#allocation2 + $0x70] sm:$0xff]
    %v43 = vld [vmem:[#allocation2 + $0x78] sm:$0xff]
    %v44 = vld [vmem:[#allocation2 + $0x80] sm:$0xff]
    %v45 = vld [vmem:[#allocation2 + $0x88] sm:$0xff]
    %v46 = vld [vmem:[#allocation2 + $0x90] sm:$0xff]
    %v47 = vld [vmem:[#allocation2 + $0x98] sm:$0xff]
    %v48 = vld [vmem:[#allocation2 + $0xa0] sm:$0xff]
    %v49 = vld [vmem:[#allocation2 + $0xa8] sm:$0xff]
    %v50 = vld [vmem:[#allocation2 + $0xb0] sm:$0xff]
    %v51 = vld [vmem:[#allocation2 + $0xb8] sm:$0xff]
    %v52 = vld [vmem:[#allocation2 + $0xc0] sm:$0xff]
    %v53 = vld [vmem:[#allocation2 + $0xc8] sm:$0xff]
    %v54 = vld [vmem:[#allocation2 + $0xd0] sm:$0xff]
    %v55 = vld [vmem:[#allocation2 + $0xd8] sm:$0xff]
    %v56 = vld [vmem:[#allocation2 + $0xe0] sm:$0xff]
    %v57 = vld [vmem:[#allocation2 + $0xe8] sm:$0xff]
    %v58 = vld [vmem:[#allocation2 + $0xf0] sm:$0xff]
    %v59 = vld [vmem:[#allocation2 + $0xf8] sm:$0xff]
    %v60 = vld [vmem:[#allocation2 + $0x100] sm:$0xff]
    %v61 = vld [vmem:[#allocation2 + $0x108] sm:$0xff]
    %v62 = vld [vmem:[#allocation2 + $0x110] sm:$0xff]
    %v63 = vld [vmem:[#allocation2 + $0x118] sm:$0xff]
    %v64 = vld [vmem:[#allocation2 + $0x120] sm:$0xff]
    %v65 = vld [vmem:[#allocation2 + $0x128] sm:$0xff]
    %v66 = vld [vmem:[#allocation2 + $0x130] sm:$0xff]
    %v67 = vld [vmem:[#allocation2 + $0x138] sm:$0xff]
    %v68 = vld [vmem:[#allocation2 + $0x140] sm:$0xff]
    %v69 = vld [vmem:[#allocation2 + $0x148] sm:$0xff]
    %v70 = vld [vmem:[#allocation2 + $0x150] sm:$0xff]
    %v71 = vld [vmem:[#allocation2 + $0x158] sm:$0xff]
    %v72 = vld [vmem:[#allocation2 + $0x160] sm:$0xff]
    %v73 = vld [vmem:[#allocation2 + $0x168] sm:$0xff]
    %v74 = vld [vmem:[#allocation2 + $0x170] sm:$0xff]
    %v75 = vld [vmem:[#allocation2 + $0x178] sm:$0xff]
    %v76 = vlaneseq
    %v77 = vand.u32 %v76, 127
    %vm78 = vcmp.eq.s32.totalorder %v77, 48
    %v79 = vsel %vm78, 1.0, 0.0
    %v80 = vld [vmem:[%s0] sm:$0xff]
    %81 = vmatprep.subr.mxu0 0.0
    %82 = vmatpush1.msra.mxu0 %v43
    %83 = vmatprep.subr.mxu0 0.0
    %84 = vmatpush1.msra.mxu0 %v42
    %85 = vmatprep.subr.mxu0 0.0
    %86 = vmatpush1.msra.mxu0 %v41
    %87 = vmatprep.subr.mxu0 0.0
    %88 = vmatpush1.msra.mxu0 %v40
    %89 = vmatprep.subr.mxu0 0.0
    %90 = vmatpush1.msra.mxu0 %v39
    %91 = vmatprep.subr.mxu0 0.0
    %92 = vmatpush1.msra.mxu0 %v38
    %93 = vmatprep.subr.mxu0 0.0
    %94 = vmatpush1.msra.mxu0 %v37
    %95 = vmatprep.subr.mxu0 0.0
    %96 = vmatpush1.msra.mxu0 %v36
    %97 = vmatprep.subr.mxu0 0.0
    %98 = vmatpush1.msra.mxu0 %v35
    %99 = vmatprep.subr.mxu0 0.0
    %100 = vmatpush1.msra.mxu0 %v34
    %101 = vmatprep.subr.mxu0 0.0
    %102 = vmatpush1.msra.mxu0 %v33
    %103 = vmatprep.subr.mxu0 0.0
    %104 = vmatpush1.msra.mxu0 %v32
    %105 = vmatprep.subr.mxu0 0.0
    %106 = vmatpush1.msra.mxu0 %v31
    %107 = vmatprep.subr.mxu0 0.0
    %108 = vmatpush1.msra.mxu0 %v30
    %109 = vmatprep.subr.mxu0 0.0
    %110 = vmatpush1.msra.mxu0 %v29
    %111 = vmatprep.subr.mxu0 0.0
    %112 = vmatpush1.msra.mxu0 %v28
    %113 = vmatprep.subr.mxu0 0.0
    %114 = vmatpush2.msra.mxu0 0.0
    %115 = vmatprep.subr.mxu0 0.0
    %116 = vmatpush2.msra.mxu0 0.0
    %117 = vmatprep.subr.mxu0 0.0
    %118 = vmatpush2.msra.mxu0 0.0
    %119 = vmatprep.subr.mxu0 0.0
    %120 = vmatpush2.msra.mxu0 0.0
    %121 = vmatprep.subr.mxu0 0.0
    %122 = vmatpush2.msra.mxu0 0.0
    %123 = vmatprep.subr.mxu0 0.0
    %124 = vmatpush2.msra.mxu0 0.0
    %125 = vmatprep.subr.mxu0 0.0
    %126 = vmatpush2.msra.mxu0 0.0
    %127 = vmatprep.subr.mxu0 0.0
    %128 = vmatpush2.msra.mxu0 0.0
    %129 = vmatprep.subr.mxu0 0.0
    %130 = vmatpush2.msra.mxu0 0.0
    %131 = vmatprep.subr.mxu0 0.0
    %132 = vmatpush2.msra.mxu0 0.0
    %133 = vmatprep.subr.mxu0 0.0
    %134 = vmatpush2.msra.mxu0 0.0
    %135 = vmatprep.subr.mxu0 0.0
    %136 = vmatpush2.msra.mxu0 0.0
    %137 = vmatprep.subr.mxu0 0.0
    %138 = vmatpush2.msra.mxu0 0.0
    %139 = vmatprep.subr.mxu0 0.0
    %140 = vmatpush2.msra.mxu0 0.0
    %141 = vmatprep.subr.mxu0 0.0
    %142 = vmatpush2.msra.mxu0 0.0
    %143 = vmatprep.subr.mxu0 0.0
    %144 = vmatpush2.msra.mxu0 0.0
    %145 = vmatprep.mubr.f32.mxu0 0.0
    %146 = vmatmul.mubr.f32.gmra.mxu0 %v80
    %v147 = vpop.f32.mrf.mxu0
    %v148 = vadd.f32 0.0, %v147
    %v149 = vpop.f32.mrf.mxu0
    %150 = vdwg.mxu0
    %v151 = vtanh.pop %v148
    %v152 = vadd.f32 %v151, %v79
    %153 = vst [vmem:[%s3] sm:$0xff] %v152
    %v154 = vld [vmem:[%s1] sm:$0xff]
    %v155 = vld [vmem:[%s3] sm:$0xff]
    %v156 = vadd.f32 %v155, %v154
    %157 = vmatprep.subr.mxu0 0.0
    %158 = vmatpush1.msra.mxu0 %v59
    %159 = vmatprep.subr.mxu0 0.0
    %160 = vmatpush1.msra.mxu0 %v58
    %161 = vmatprep.subr.mxu0 0.0
    %162 = vmatpush1.msra.mxu0 %v57
    %163 = vmatprep.subr.mxu0 0.0
    %164 = vmatpush1.msra.mxu0 %v56
    %165 = vmatprep.subr.mxu0 0.0
    %166 = vmatpush1.msra.mxu0 %v55
    %167 = vmatprep.subr.mxu0 0.0
    %168 = vmatpush1.msra.mxu0 %v54
    %169 = vmatprep.subr.mxu0 0.0
    %170 = vmatpush1.msra.mxu0 %v53
    %171 = vmatprep.subr.mxu0 0.0
    %172 = vmatpush1.msra.mxu0 %v52
    %173 = vmatprep.subr.mxu0 0.0
    %174 = vmatpush1.msra.mxu0 %v51
    %175 = vmatprep.subr.mxu0 0.0
    %176 = vmatpush1.msra.mxu0 %v50
    %177 = vmatprep.subr.mxu0 0.0
    %178 = vmatpush1.msra.mxu0 %v49
    %179 = vmatprep.subr.mxu0 0.0
    %180 = vmatpush1.msra.mxu0 %v48
    %181 = vmatprep.subr.mxu0 0.0
    %182 = vmatpush1.msra.mxu0 %v47
    %183 = vmatprep.subr.mxu0 0.0
    %184 = vmatpush1.msra.mxu0 %v46
    %185 = vmatprep.subr.mxu0 0.0
    %186 = vmatpush1.msra.mxu0 %v45
    %187 = vmatprep.subr.mxu0 0.0
    %188 = vmatpush1.msra.mxu0 %v44
    %189 = vmatprep.subr.mxu0 0.0
    %190 = vmatpush2.msra.mxu0 0.0
    %191 = vmatprep.subr.mxu0 0.0
    %192 = vmatpush2.msra.mxu0 0.0
    %193 = vmatprep.subr.mxu0 0.0
    %194 = vmatpush2.msra.mxu0 0.0
    %195 = vmatprep.subr.mxu0 0.0
    %196 = vmatpush2.msra.mxu0 0.0
    %197 = vmatprep.subr.mxu0 0.0
    %198 = vmatpush2.msra.mxu0 0.0
    %199 = vmatprep.subr.mxu0 0.0
    %200 = vmatpush2.msra.mxu0 0.0
    %201 = vmatprep.subr.mxu0 0.0
    %202 = vmatpush2.msra.mxu0 0.0
    %203 = vmatprep.subr.mxu0 0.0
    %204 = vmatpush2.msra.mxu0 0.0
    %205 = vmatprep.subr.mxu0 0.0
    %206 = vmatpush2.msra.mxu0 0.0
    %207 = vmatprep.subr.mxu0 0.0
    %208 = vmatpush2.msra.mxu0 0.0
    %209 = vmatprep.subr.mxu0 0.0
    %210 = vmatpush2.msra.mxu0 0.0
    %211 = vmatprep.subr.mxu0 0.0
    %212 = vmatpush2.msra.mxu0 0.0
    %213 = vmatprep.subr.mxu0 0.0
    %214 = vmatpush2.msra.mxu0 0.0
    %215 = vmatprep.subr.mxu0 0.0
    %216 = vmatpush2.msra.mxu0 0.0
    %217 = vmatprep.subr.mxu0 0.0
    %218 = vmatpush2.msra.mxu0 0.0
    %219 = vmatprep.subr.mxu0 0.0
    %220 = vmatpush2.msra.mxu0 0.0
    %221 = vmatprep.mubr.f32.mxu0 0.0
    %222 = vmatmul.mubr.f32.gmra.mxu0 %v156
    %v223 = vpop.f32.mrf.mxu0
    %v224 = vadd.f32 0.0, %v223
    %v225 = vpop.f32.mrf.mxu0
    %226 = vdwg.mxu0
    %v227 = vtanh.pop %v224
    %228 = vst [vmem:[%s3] sm:$0xff] %v227
    %v229 = vld [vmem:[%s3] sm:$0xff]
    %v230 = vtanh.pop %v229
    %v231 = vadd.f32 %v230, %v79
    %232 = vmatprep.subr.mxu0 0.0
    %233 = vmatpush1.msra.mxu0 %v75
    %234 = vmatprep.subr.mxu0 0.0
    %235 = vmatpush1.msra.mxu0 %v74
    %236 = vmatprep.subr.mxu0 0.0
    %237 = vmatpush1.msra.mxu0 %v73
    %238 = vmatprep.subr.mxu0 0.0
    %239 = vmatpush1.msra.mxu0 %v72
    %240 = vmatprep.subr.mxu0 0.0
    %241 = vmatpush1.msra.mxu0 %v71
    %242 = vmatprep.subr.mxu0 0.0
    %243 = vmatpush1.msra.mxu0 %v70
    %244 = vmatprep.subr.mxu0 0.0
    %245 = vmatpush1.msra.mxu0 %v69
    %246 = vmatprep.subr.mxu0 0.0
    %247 = vmatpush1.msra.mxu0 %v68
    %248 = vmatprep.subr.mxu0 0.0
    %249 = vmatpush1.msra.mxu0 %v67
    %250 = vmatprep.subr.mxu0 0.0
    %251 = vmatpush1.msra.mxu0 %v66
    %252 = vmatprep.subr.mxu0 0.0
    %253 = vmatpush1.msra.mxu0 %v65
    %254 = vmatprep.subr.mxu0 0.0
    %255 = vmatpush1.msra.mxu0 %v64
    %256 = vmatprep.subr.mxu0 0.0
    %257 = vmatpush1.msra.mxu0 %v63
    %258 = vmatprep.subr.mxu0 0.0
    %259 = vmatpush1.msra.mxu0 %v62
    %260 = vmatprep.subr.mxu0 0.0
    %261 = vmatpush1.msra.mxu0 %v61
    %262 = vmatprep.subr.mxu0 0.0
    %263 = vmatpush1.msra.mxu0 %v60
    %264 = vmatprep.subr.mxu0 0.0
    %265 = vmatpush2.msra.mxu0 0.0
    %266 = vmatprep.subr.mxu0 0.0
    %267 = vmatpush2.msra.mxu0 0.0
    %268 = vmatprep.subr.mxu0 0.0
    %269 = vmatpush2.msra.mxu0 0.0
    %270 = vmatprep.subr.mxu0 0.0
    %271 = vmatpush2.msra.mxu0 0.0
    %272 = vmatprep.subr.mxu0 0.0
    %273 = vmatpush2.msra.mxu0 0.0
    %274 = vmatprep.subr.mxu0 0.0
    %275 = vmatpush2.msra.mxu0 0.0
    %276 = vmatprep.subr.mxu0 0.0
    %277 = vmatpush2.msra.mxu0 0.0
    %278 = vmatprep.subr.mxu0 0.0
    %279 = vmatpush2.msra.mxu0 0.0
    %280 = vmatprep.subr.mxu0 0.0
    %281 = vmatpush2.msra.mxu0 0.0
    %282 = vmatprep.subr.mxu0 0.0
    %283 = vmatpush2.msra.mxu0 0.0
    %284 = vmatprep.subr.mxu0 0.0
    %285 = vmatpush2.msra.mxu0 0.0
    %286 = vmatprep.subr.mxu0 0.0
    %287 = vmatpush2.msra.mxu0 0.0
    %288 = vmatprep.subr.mxu0 0.0
    %289 = vmatpush2.msra.mxu0 0.0
    %290 = vmatprep.subr.mxu0 0.0
    %291 = vmatpush2.msra.mxu0 0.0
    %292 = vmatprep.subr.mxu0 0.0
    %293 = vmatpush2.msra.mxu0 0.0
    %294 = vmatprep.subr.mxu0 0.0
    %295 = vmatpush2.msra.mxu0 0.0
    %296 = vmatprep.mubr.f32.mxu0 0.0
    %297 = vmatmul.mubr.f32.gmra.mxu0 %v231
    %v298 = vpop.f32.mrf.mxu0
    %v299 = vadd.f32 0.0, %v298
    %v300 = vpop.f32.mrf.mxu0
    %301 = vdwg.mxu0
    %v302 = vtanh.pop %v299
    %v303 = vadd.f32 %v229, %v302
    %304 = vst [vmem:[%s3] sm:$0xff] %v303
    // Predicated region
    $region18: #{_forward_core.1} parent=1 // pred_check
      _
    $region19: #{_forward_core.1} parent=1 // pred_check_branch
      %306 = sbr.rel (0) target = $region21
    $region20: #{_forward_core.1} parent=1 // pred_region
      _
    $region21: #{_forward_core.1} parent=1 // pred_fallthru
      _
    // Predicated region
    $region22: #{_forward_core.1} parent=1 // pred_check
      _
    $region23: #{_forward_core.1} parent=1 // pred_check_branch
      %308 = sbr.rel (0) target = $region25
    $region24: #{_forward_core.1} parent=1 // pred_region
      _
    $region25: #{_forward_core.1} parent=1 // pred_fallthru
      _
    %309 = vsyncpa [#allocation3], 1

</llo_original>
